<compile_context>
chip_gen: v7x
topology: tpu7x:2x2x1
jax: 0.10.0
libtpu: 0.0.40
codegen_flags: <defaults>
</compile_context>

<pallas_src>
import functools
import math

import jax
import jax.numpy as jnp
from jax import lax
from jax.experimental import pallas as pl
from jax.experimental.pallas import tpu as pltpu


def _round_up(x, m):
    return ((x + m - 1) // m) * m


def _contract_features(w, x_node_major):
    """w: (F_out, F_in), x: (TILE_N, F_in) -> (F_out, TILE_N).

    Contracts both operands' feature axes; lowers as a transposed-RHS MXU
    matmul (no explicit transpose of the x tile is materialized).
    """
    return lax.dot_general(
        w, x_node_major,
        dimension_numbers=(((1,), (1,)), ((), ())),
        preferred_element_type=jnp.float32)


def _graph_mlp_kernel(n_hidden, *refs):
    """refs = (x_ref, w0, b0, ..., w_fold, b_fold, out_ref).

    Hidden weights are (F_out, F_in) with (F_out, 1) biases (feature-major).
    The folded last layer is a (F_prev, 1) column (or (1, F_in) row when there
    are no hidden layers) with a (1, 1) bias.  Output block is a lane-dense
    (1, TILE_N) row.
    """
    x_ref = refs[0]
    o_ref = refs[-1]
    params = refs[1:-1]

    x = x_ref[...].astype(jnp.float32)                 # (TILE_N, F_IN), node-major

    if n_hidden == 0:
        w_last = params[0][...]                        # (1, F_IN)
        b_last = params[1][...]                        # (1, 1)
        row = _contract_features(w_last, x) + b_last   # (1, TILE_N)
    else:
        w0 = params[0][...]                            # (F_1, F_IN)
        b0 = params[1][...]                            # (F_1, 1)
        z = jnp.tanh(_contract_features(w0, x) + b0)   # (F_1, TILE_N)
        for i in range(1, n_hidden):
            w = params[2 * i][...]                     # (F_{i+1}, F_i)
            b = params[2 * i + 1][...]                 # (F_{i+1}, 1)
            z = jnp.tanh(jnp.dot(w, z, preferred_element_type=jnp.float32) + b)
        w_col = params[2 * n_hidden][...]              # (F_prev, 1)
        b_last = params[2 * n_hidden + 1][...]         # (1, 1)
        # Folded last layer: VPU multiply + sublane reduce instead of an
        # M=1 MXU matvec (z is already feature-major in vregs).
        row = jnp.sum(w_col * z, axis=0, keepdims=True) + b_last   # (1, TILE_N)

    o_ref[...] = jnp.tanh(row).astype(o_ref.dtype)


def _tile_vmem_bytes(tile_n, f_in, hidden_widths):
    """Working-set estimate for one grid step (f32, lane/sublane padded)."""
    lane, sub = 128, 8
    x_buf = 2 * tile_n * max(_round_up(f_in, lane), lane) * 4      # double-buffered x
    out_buf = 2 * sub * tile_n * 4                                 # (1, tile_n) -> 8 sublanes, x2
    act_w = max([_round_up(w, sub) for w in hidden_widths], default=sub)
    act_buf = 2 * act_w * tile_n * 4                               # ~two live activation tiles
    return x_buf + out_buf + act_buf


def _pick_tile_n(n_nodes, f_in, hidden_widths, *, max_tile=16384,
                 vmem_budget_bytes=24 * 1024 * 1024):
    """Largest lane-aligned node tile fitting the VMEM working-set budget."""
    lane = 128
    tile = min(max_tile, _round_up(n_nodes, lane))
    # Enough work -> give each TensorCore (v7x megacore) at least one block.
    if n_nodes >= 8192:
        tile = min(tile, _round_up(pl.cdiv(n_nodes, 2), lane))
    tile = _round_up(tile, lane)
    while tile > lane and _tile_vmem_bytes(tile, f_in, hidden_widths) > vmem_budget_bytes:
        tile = _round_up(tile // 2, lane)
    return max(tile, lane)


def graph_mlp_forward(x, weights, biases, *, tile_n=None):
    """x: (N, F_in); weights[i]: (F_i, F_{i+1}); biases[i]: (1, F_{i+1}).

    Matches Graph_mlp.forward with activation=tanh:
        z = x; for each layer: z = Linear(z), tanh between layers;
        out = tanh(mean(z, axis=1))  ->  shape (N,)
    """
    assert len(weights) == len(biases) and len(weights) >= 1
    n_nodes, f_in = x.shape
    n_layers = len(weights)
    n_hidden = n_layers - 1
    hidden_widths = [int(weights[i].shape[1]) for i in range(n_hidden)]

    # Fold the last Linear + feature-mean into a single matvec (exact: no
    # activation after the last Linear).
    w_fold_vec = jnp.mean(weights[-1].astype(jnp.float32), axis=1)            # (F_prev,)
    if n_hidden == 0:
        w_fold = w_fold_vec[None, :]                                          # (1, F_in)
    else:
        w_fold = w_fold_vec[:, None]                                          # (F_prev, 1)
    b_fold = jnp.mean(biases[-1].astype(jnp.float32)).reshape(1, 1)           # (1, 1)

    # Hidden layers in feature-major layout: W^T (F_out, F_in), bias (F_out, 1).
    params = []
    for i in range(n_hidden):
        params.append(jnp.asarray(weights[i], jnp.float32).T)
        params.append(jnp.asarray(biases[i], jnp.float32).reshape(-1, 1))
    params.append(w_fold)
    params.append(b_fold)

    if tile_n is None:
        tile_n = _pick_tile_n(n_nodes, f_in, hidden_widths)
    tile_n = _round_up(int(tile_n), 128)

    grid_n = pl.cdiv(n_nodes, tile_n)
    padded_n = grid_n * tile_n

    x32 = jnp.asarray(x, jnp.float32)
    if padded_n != n_nodes:
        # Zero-pad the node axis so every grid step gets a full tile (padded
        # rows produce harmless values that are sliced off below).
        x32 = jnp.pad(x32, ((0, padded_n - n_nodes), (0, 0)))

    in_specs = [pl.BlockSpec((tile_n, f_in), lambda i: (i, 0))]   # streamed
    for p in params:                                              # VMEM-resident
        in_specs.append(pl.BlockSpec(p.shape, lambda i: (0, 0)))

    out_specs = pl.BlockSpec((1, tile_n), lambda i: (0, i))       # lane-dense row
    out_shape = jax.ShapeDtypeStruct((1, padded_n), jnp.float32)

    # Raise the scoped-VMEM limit to cover the large tiles (capped well below
    # v7x's 64 MiB physical VMEM, so safe on every generation).
    work_bytes = (_tile_vmem_bytes(tile_n, f_in, hidden_widths)
                  + sum(int(p.size) * 4 for p in params))
    vmem_limit = int(min(max(2 * work_bytes, 32 * 1024 * 1024), 48 * 1024 * 1024))

    # Advisory cost for XLA's scheduler around the custom call.
    dims = [f_in] + [int(w.shape[1]) for w in weights]
    flops = sum(2 * n_nodes * dims[i] * dims[i + 1] for i in range(n_hidden))
    flops += 2 * n_nodes * dims[-2]                        # folded matvec
    transcendentals = n_nodes * (sum(dims[1:-1]) + 1)      # hidden tanh + final tanh
    bytes_accessed = int(x.size) * 4 + n_nodes * 4 + sum(int(p.size) * 4 for p in params)

    kernel = functools.partial(_graph_mlp_kernel, n_hidden)
    out = pl.pallas_call(
        kernel,
        grid=(grid_n,),
        in_specs=in_specs,
        out_specs=out_specs,
        out_shape=out_shape,
        compiler_params=pltpu.CompilerParams(
            dimension_semantics=("parallel",),
            vmem_limit_bytes=vmem_limit),
        cost_estimate=pl.CostEstimate(
            flops=flops,
            transcendentals=transcendentals,
            bytes_accessed=bytes_accessed),
    )(x32, *params)
    return out[0, :n_nodes]   # (N,), matching torch.mean(z, 1) on a 2-D input


def _reference(x, weights, biases):
    z = x.astype(jnp.float32)
    for i, (w, b) in enumerate(zip(weights, biases)):
        z = z @ w + b
        if i != len(weights) - 1:
            z = jnp.tanh(z)
    return jnp.tanh(jnp.mean(z, axis=1))


if __name__ == "__main__":
    # Module config: Graph_mlp(input=32, layers=[64, 16]).
    N_NODES = 300          # not a multiple of 128 -> exercises the padding path
    F_IN = 32
    LAYERS = [64, 16]

    key = jax.random.PRNGKey(0)
    k_x, *k_params = jax.random.split(key, 1 + 2 * len(LAYERS))

    x = jax.random.normal(k_x, (N_NODES, F_IN), dtype=jnp.float32)

    dims = [F_IN] + LAYERS
    weights, biases = [], []
    for i in range(len(LAYERS)):
        fan_in, fan_out = dims[i], dims[i + 1]
        bound = 1.0 / math.sqrt(fan_in)
        w = jax.random.uniform(
            k_params[2 * i], (fan_in, fan_out), minval=-bound, maxval=bound,
            dtype=jnp.float32)
        b = jax.random.uniform(
            k_params[2 * i + 1], (1, fan_out), minval=-bound, maxval=bound,
            dtype=jnp.float32)
        weights.append(w)
        biases.append(b)

    out = graph_mlp_forward(x, weights, biases)   # auto tile: one 384-node block
    jax.block_until_ready(out)

    ref = _reference(x, weights, biases)
    assert out.shape == (N_NODES,)
    assert jnp.allclose(out, ref, atol=1e-5, rtol=1e-5), "mismatch vs JAX reference"

    print("KERNEL_OK")
</pallas_src>

<mosaic_0001>
module attributes {stable_mosaic.version = 11 : i64} {
  func.func @_graph_mlp_kernel(%arg0: i32, %arg1: memref<384x32xf32, #tpu.memory_space<vmem>>, %arg2: memref<64x32xf32, #tpu.memory_space<vmem>>, %arg3: memref<64x1xf32, #tpu.memory_space<vmem>>, %arg4: memref<64x1xf32, #tpu.memory_space<vmem>>, %arg5: memref<1x1xf32, #tpu.memory_space<vmem>>, %arg6: memref<1x384xf32, #tpu.memory_space<vmem>>) attributes {dimension_semantics = [#tpu.dimension_semantics<parallel>], iteration_bounds = array<i64: 1>, scalar_prefetch = 0 : i64, scratch_operands = 0 : i64, tpu.core_type = #tpu.core_type<tc>, window_params = [{transform_indices = @transform_0, window_bounds = array<i64: 384, 32>}, {pipeline_mode = #tpu.pipeline_mode<synchronous>, transform_indices = @transform_1, window_bounds = array<i64: 64, 32>}, {pipeline_mode = #tpu.pipeline_mode<synchronous>, transform_indices = @transform_2, window_bounds = array<i64: 64, 1>}, {pipeline_mode = #tpu.pipeline_mode<synchronous>, transform_indices = @transform_3, window_bounds = array<i64: 64, 1>}, {pipeline_mode = #tpu.pipeline_mode<synchronous>, transform_indices = @transform_4, window_bounds = array<i64: 1, 1>}, {transform_indices = @transform_5, window_bounds = array<i64: 1, 384>}]} {
    %c0 = arith.constant 0 : index
    %c0_0 = arith.constant 0 : index
    %0 = vector.load %arg1[%c0, %c0_0] : memref<384x32xf32, #tpu.memory_space<vmem>>, vector<384x32xf32>
    %c0_1 = arith.constant 0 : index
    %c0_2 = arith.constant 0 : index
    %1 = vector.load %arg2[%c0_1, %c0_2] : memref<64x32xf32, #tpu.memory_space<vmem>>, vector<64x32xf32>
    %c0_3 = arith.constant 0 : index
    %c0_4 = arith.constant 0 : index
    %2 = vector.load %arg3[%c0_3, %c0_4] : memref<64x1xf32, #tpu.memory_space<vmem>>, vector<64x1xf32>
    %cst = arith.constant dense<0.000000e+00> : vector<64x384xf32>
    %3 = tpu.matmul %1, %0, %cst {dimension_numbers = #tpu.dot_dimension_numbers<[1], [1], [0], [0], [0, 0, 1, 0], [], []>} : vector<64x32xf32>, vector<384x32xf32>, vector<64x384xf32> -> vector<64x384xf32>
    %4 = vector.broadcast %2 : vector<64x1xf32> to vector<64x384xf32>
    %5 = arith.addf %3, %4 : vector<64x384xf32>
    %6 = math.tanh %5 : vector<64x384xf32>
    %c0_5 = arith.constant 0 : index
    %c0_6 = arith.constant 0 : index
    %7 = vector.load %arg4[%c0_5, %c0_6] : memref<64x1xf32, #tpu.memory_space<vmem>>, vector<64x1xf32>
    %c0_7 = arith.constant 0 : index
    %c0_8 = arith.constant 0 : index
    %8 = vector.load %arg5[%c0_7, %c0_8] : memref<1x1xf32, #tpu.memory_space<vmem>>, vector<1x1xf32>
    %9 = vector.broadcast %7 : vector<64x1xf32> to vector<64x384xf32>
    %10 = arith.mulf %9, %6 : vector<64x384xf32>
    %cst_9 = arith.constant dense<0.000000e+00> : vector<384xf32>
    %11 = vector.multi_reduction <add>, %10, %cst_9 [0] : vector<64x384xf32> to vector<384xf32>
    %12 = vector.shape_cast %11 : vector<384xf32> to vector<1x384xf32>
    %13 = vector.broadcast %8 : vector<1x1xf32> to vector<1x384xf32>
    %14 = arith.addf %12, %13 : vector<1x384xf32>
    %15 = math.tanh %14 : vector<1x384xf32>
    %c0_10 = arith.constant 0 : index
    %c0_11 = arith.constant 0 : index
    %16 = vector.load %arg6[%c0_10, %c0_11] : memref<1x384xf32, #tpu.memory_space<vmem>>, vector<1x384xf32>
    tpu.vector_store %arg6[%c0_10, %c0_11], %15 {strides = array<i32>} : memref<1x384xf32, #tpu.memory_space<vmem>>, vector<1x384xf32>,
    return
  }
  func.func @transform_0(%arg0: i32) -> (i32, i32) {
    %c0_i32 = arith.constant 0 : i32
    %c0_i32_0 = arith.constant 0 : i32
    return %arg0, %c0_i32 : i32, i32
  }
  func.func @transform_1(%arg0: i32) -> (i32, i32) {
    %c0_i32 = arith.constant 0 : i32
    %c0_i32_0 = arith.constant 0 : i32
    %c0_i32_1 = arith.constant 0 : i32
    return %c0_i32, %c0_i32_0 : i32, i32
  }
  func.func @transform_2(%arg0: i32) -> (i32, i32) {
    %c0_i32 = arith.constant 0 : i32
    %c0_i32_0 = arith.constant 0 : i32
    %c0_i32_1 = arith.constant 0 : i32
    return %c0_i32, %c0_i32_0 : i32, i32
  }
  func.func @transform_3(%arg0: i32) -> (i32, i32) {
    %c0_i32 = arith.constant 0 : i32
    %c0_i32_0 = arith.constant 0 : i32
    %c0_i32_1 = arith.constant 0 : i32
    return %c0_i32, %c0_i32_0 : i32, i32
  }
  func.func @transform_4(%arg0: i32) -> (i32, i32) {
    %c0_i32 = arith.constant 0 : i32
    %c0_i32_0 = arith.constant 0 : i32
    %c0_i32_1 = arith.constant 0 : i32
    return %c0_i32, %c0_i32_0 : i32, i32
  }
  func.func @transform_5(%arg0: i32) -> (i32, i32) {
    %c0_i32 = arith.constant 0 : i32
    %c0_i32_0 = arith.constant 0 : i32
    return %c0_i32, %arg0 : i32, i32
  }
}

</mosaic_0001>

<llo_original>
// kernel: tpu_custom_call.1
$region0: #{tpu_custom_call.1}
  #allocation0 [shape = 'u32[]', space=smem, size = 0x4, offset = 0x4, fixed_abs, tag = 'smem constant byte address 0x4 - core index']
  #allocation1 [shape = 'u32[144,128]{1,0:T(1,128)}', space=vmem, size = 0x12000, scoped, tag = 'internal scratch']
  #allocation2 [shape = 'f32[1,1]{1,0:T(1,128)S(1)}', space=vmem, size = 0x200, scoped, tag = 'scoped memory for tpu_custom_call.1']
  %s0 = inlined_call_operand.vmem [shape: f32[384,32], index: 0, kind: input, shape index: {}]
  %s1 = inlined_call_operand.vmem [shape: f32[64,32], index: 1, kind: input, shape index: {}]
  %s2 = inlined_call_operand.vmem [shape: f32[64,1], index: 2, kind: input, shape index: {}]
  %s3 = inlined_call_operand.vmem [shape: f32[64,1], index: 3, kind: input, shape index: {}]
  %s4 = inlined_call_operand.<no memory space> [shape: f32[1,1], index: 4, kind: input, shape index: {}]
  %s5 = inlined_call_operand.hbm [shape: f32[1,384], index: 5, kind: output, shape index: {}]
  %s6 = sld [smem:[#allocation0]]
  $region30: #{tpu_custom_call.1} parent=0
    _
  %s8 = ssub.s32 1, %s6
  %s9 = scalar_select 0, %s8, %s6
  %v10 = vstv %s4
  %11 = vst [vmem:[#allocation2] sm:$0x1] %v10
  $region1: #{tpu_custom_call.1} parent=0
    #allocation3 [shape = 'u8[1536]{0}', space=vmem, size = 0x800, scoped, tag = 'output window, operand 0, single buffered']
    #allocation4 [shape = 's32[1]{0}', space=sflag, size = 0x4, scoped, tag = 'scoped memory for tpu_custom_call.1']
    %12 = vsyncpa [#allocation4], 0
    // Predicated region
    $region2: #{tpu_custom_call.1} parent=1 // pred_check
      _
    $region3: #{tpu_custom_call.1} parent=1 // pred_check_branch
      %14 = sbr.rel (0) target = $region5
    $region4: #{tpu_custom_call.1} parent=1 // pred_region
      _
    $region5: #{tpu_custom_call.1} parent=1 // pred_fallthru
      _
    // Predicated region
    $region6: #{tpu_custom_call.1} parent=1 // pred_check
      _
    $region7: #{tpu_custom_call.1} parent=1 // pred_check_branch
      %16 = sbr.rel (0) target = $region9
    $region8: #{tpu_custom_call.1} parent=1 // pred_region
      _
    $region9: #{tpu_custom_call.1} parent=1 // pred_fallthru
      _
    // Predicated region
    $region10: #{tpu_custom_call.1} parent=1 // pred_check
      _
    $region11: #{tpu_custom_call.1} parent=1 // pred_check_branch
      %18 = sbr.rel (0) target = $region13
    $region12: #{tpu_custom_call.1} parent=1 // pred_region
      _
    $region13: #{tpu_custom_call.1} parent=1 // pred_fallthru
      _
    // Predicated region
    $region14: #{tpu_custom_call.1} parent=1 // pred_check
      _
    $region15: #{tpu_custom_call.1} parent=1 // pred_check_branch
      %20 = sbr.rel (0) target = $region17
    $region16: #{tpu_custom_call.1} parent=1 // pred_region
      _
    $region17: #{tpu_custom_call.1} parent=1 // pred_fallthru
      _
    // Predicated region
    $region18: #{tpu_custom_call.1} parent=1 // pred_check
      _
    $region19: #{tpu_custom_call.1} parent=1 // pred_check_branch
      %22 = sbr.rel (0) target = $region21
    $region20: #{tpu_custom_call.1} parent=1 // pred_region
      _
    $region21: #{tpu_custom_call.1} parent=1 // pred_fallthru
      _
    %v23 = vld [vmem:[%s0] sm:$0xff]
    %v24 = vld [vmem:[%s0 + $0x8] sm:$0xff]
    %v25 = vld [vmem:[%s0 + $0x10] sm:$0xff]
    %v26 = vld [vmem:[%s0 + $0x18] sm:$0xff]
    %v27 = vld [vmem:[%s0 + $0x20] sm:$0xff]
    %v28 = vld [vmem:[%s0 + $0x28] sm:$0xff]
    %v29 = vld [vmem:[%s0 + $0x30] sm:$0xff]
    %v30 = vld [vmem:[%s0 + $0x38] sm:$0xff]
    %v31 = vld [vmem:[%s0 + $0x40] sm:$0xff]
    %v32 = vld [vmem:[%s0 + $0x48] sm:$0xff]
    %v33 = vld [vmem:[%s0 + $0x50] sm:$0xff]
    %v34 = vld [vmem:[%s0 + $0x58] sm:$0xff]
    %v35 = vld [vmem:[%s0 + $0x60] sm:$0xff]
    %v36 = vld [vmem:[%s0 + $0x68] sm:$0xff]
    %v37 = vld [vmem:[%s0 + $0x70] sm:$0xff]
    %v38 = vld [vmem:[%s0 + $0x78] sm:$0xff]
    %v39 = vld [vmem:[%s0 + $0x80] sm:$0xff]
    %v40 = vld [vmem:[%s0 + $0x88] sm:$0xff]
    %v41 = vld [vmem:[%s0 + $0x90] sm:$0xff]
    %v42 = vld [vmem:[%s0 + $0x98] sm:$0xff]
    %v43 = vld [vmem:[%s0 + $0xa0] sm:$0xff]
    %v44 = vld [vmem:[%s0 + $0xa8] sm:$0xff]
    %v45 = vld [vmem:[%s0 + $0xb0] sm:$0xff]
    %v46 = vld [vmem:[%s0 + $0xb8] sm:$0xff]
    %v47 = vld [vmem:[%s0 + $0xc0] sm:$0xff]
    %v48 = vld [vmem:[%s0 + $0xc8] sm:$0xff]
    %v49 = vld [vmem:[%s0 + $0xd0] sm:$0xff]
    %v50 = vld [vmem:[%s0 + $0xd8] sm:$0xff]
    %v51 = vld [vmem:[%s0 + $0xe0] sm:$0xff]
    %v52 = vld [vmem:[%s0 + $0xe8] sm:$0xff]
    %v53 = vld [vmem:[%s0 + $0xf0] sm:$0xff]
    %v54 = vld [vmem:[%s0 + $0xf8] sm:$0xff]
    %v55 = vld [vmem:[%s0 + $0x100] sm:$0xff]
    %v56 = vld [vmem:[%s0 + $0x108] sm:$0xff]
    %v57 = vld [vmem:[%s0 + $0x110] sm:$0xff]
    %v58 = vld [vmem:[%s0 + $0x118] sm:$0xff]
    %v59 = vld [vmem:[%s0 + $0x120] sm:$0xff]
    %v60 = vld [vmem:[%s0 + $0x128] sm:$0xff]
    %v61 = vld [vmem:[%s0 + $0x130] sm:$0xff]
    %v62 = vld [vmem:[%s0 + $0x138] sm:$0xff]
    %v63 = vld [vmem:[%s0 + $0x140] sm:$0xff]
    %v64 = vld [vmem:[%s0 + $0x148] sm:$0xff]
    %v65 = vld [vmem:[%s0 + $0x150] sm:$0xff]
    %v66 = vld [vmem:[%s0 + $0x158] sm:$0xff]
    %v67 = vld [vmem:[%s0 + $0x160] sm:$0xff]
    %v68 = vld [vmem:[%s0 + $0x168] sm:$0xff]
    %v69 = vld [vmem:[%s0 + $0x170] sm:$0xff]
    %v70 = vld [vmem:[%s0 + $0x178] sm:$0xff]
    %v71 = vld [vmem:[%s1] sm:$0xff]
    %v72 = vld [vmem:[%s1 + $0x8] sm:$0xff]
    %v73 = vld [vmem:[%s1 + $0x10] sm:$0xff]
    %v74 = vld [vmem:[%s1 + $0x18] sm:$0xff]
    %v75 = vld [vmem:[%s1 + $0x20] sm:$0xff]
    %v76 = vld [vmem:[%s1 + $0x28] sm:$0xff]
    %v77 = vld [vmem:[%s1 + $0x30] sm:$0xff]
    %v78 = vld [vmem:[%s1 + $0x38] sm:$0xff]
    %v79 = vld [vmem:[%s2] sm:$0xff]
    %v80 = vld [vmem:[%s2 + $0x8] sm:$0xff]
    %v81 = vld [vmem:[%s2 + $0x10] sm:$0xff]
    %v82 = vld [vmem:[%s2 + $0x18] sm:$0xff]
    %v83 = vld [vmem:[%s2 + $0x20] sm:$0xff]
    %v84 = vld [vmem:[%s2 + $0x28] sm:$0xff]
    %v85 = vld [vmem:[%s2 + $0x30] sm:$0xff]
    %v86 = vld [vmem:[%s2 + $0x38] sm:$0xff]
    %88 = vset.pattern.permute.xlu0 0
    %89 = vperm.xlu0 %88, %v79
    %v90 = vpop.permute.xlu0 %89
    %93 = vset.pattern.permute.xlu0 0
    %94 = vperm.xlu0 %93, %v80
    %v95 = vpop.permute.xlu0 %94
    %98 = vset.pattern.permute.xlu0 0
    %99 = vperm.xlu0 %98, %v81
    %v100 = vpop.permute.xlu0 %99
    %103 = vset.pattern.permute.xlu0 0
    %104 = vperm.xlu0 %103, %v82
    %v105 = vpop.permute.xlu0 %104
    %108 = vset.pattern.permute.xlu0 0
    %109 = vperm.xlu0 %108, %v83
    %v110 = vpop.permute.xlu0 %109
    %113 = vset.pattern.permute.xlu0 0
    %114 = vperm.xlu0 %113, %v84
    %v115 = vpop.permute.xlu0 %114
    %118 = vset.pattern.permute.xlu0 0
    %119 = vperm.xlu0 %118, %v85
    %v120 = vpop.permute.xlu0 %119
    %123 = vset.pattern.permute.xlu0 0
    %124 = vperm.xlu0 %123, %v86
    %v125 = vpop.permute.xlu0 %124
    %vm127 = vcmask 261120
    %v129 = vsel %vm127, %v71, 0
    %v132 = vsel %vm127, %v72, 0
    %v135 = vsel %vm127, %v73, 0
    %v138 = vsel %vm127, %v74, 0
    %v141 = vsel %vm127, %v75, 0
    %v144 = vsel %vm127, %v76, 0
    %v147 = vsel %vm127, %v77, 0
    %v150 = vsel %vm127, %v78, 0
    %v153 = vsel %vm127, %v23, 0
    %v156 = vsel %vm127, %v24, 0
    %v159 = vsel %vm127, %v25, 0
    %v162 = vsel %vm127, %v26, 0
    %v165 = vsel %vm127, %v27, 0
    %v168 = vsel %vm127, %v28, 0
    %v171 = vsel %vm127, %v29, 0
    %v174 = vsel %vm127, %v30, 0
    %v177 = vsel %vm127, %v31, 0
    %v180 = vsel %vm127, %v32, 0
    %v183 = vsel %vm127, %v33, 0
    %v186 = vsel %vm127, %v34, 0
    %v189 = vsel %vm127, %v35, 0
    %v192 = vsel %vm127, %v36, 0
    %v195 = vsel %vm127, %v37, 0
    %v198 = vsel %vm127, %v38, 0
    %v201 = vsel %vm127, %v39, 0
    %v204 = vsel %vm127, %v40, 0
    %v207 = vsel %vm127, %v41, 0
    %v210 = vsel %vm127, %v42, 0
    %v213 = vsel %vm127, %v43, 0
    %v216 = vsel %vm127, %v44, 0
    %v219 = vsel %vm127, %v45, 0
    %v222 = vsel %vm127, %v46, 0
    %v225 = vsel %vm127, %v47, 0
    %v228 = vsel %vm127, %v48, 0
    %v231 = vsel %vm127, %v49, 0
    %v234 = vsel %vm127, %v50, 0
    %v237 = vsel %vm127, %v51, 0
    %v240 = vsel %vm127, %v52, 0
    %v243 = vsel %vm127, %v53, 0
    %v246 = vsel %vm127, %v54, 0
    %v249 = vsel %vm127, %v55, 0
    %v252 = vsel %vm127, %v56, 0
    %v255 = vsel %vm127, %v57, 0
    %v258 = vsel %vm127, %v58, 0
    %v261 = vsel %vm127, %v59, 0
    %v264 = vsel %vm127, %v60, 0
    %v267 = vsel %vm127, %v61, 0
    %v270 = vsel %vm127, %v62, 0
    %v273 = vsel %vm127, %v63, 0
    %v276 = vsel %vm127, %v64, 0
    %v279 = vsel %vm127, %v65, 0
    %v282 = vsel %vm127, %v66, 0
    %v285 = vsel %vm127, %v67, 0
    %v288 = vsel %vm127, %v68, 0
    %v291 = vsel %vm127, %v69, 0
    %v294 = vsel %vm127, %v70, 0
    %296 = vmatprep.subr.mxu0 0.0
    %297 = vmatpush1.xpose.msra.mxu0 %v153
    %298 = vmatprep.subr.mxu0 0.0
    %299 = vmatpush1.xpose.msra.mxu0 %v156
    %300 = vmatprep.subr.mxu0 0.0
    %301 = vmatpush1.xpose.msra.mxu0 %v159
    %302 = vmatprep.subr.mxu0 0.0
    %303 = vmatpush1.xpose.msra.mxu0 %v162
    %304 = vmatprep.subr.mxu0 0.0
    %305 = vmatpush1.xpose.msra.mxu0 %v165
    %306 = vmatprep.subr.mxu0 0.0
    %307 = vmatpush1.xpose.msra.mxu0 %v168
    %308 = vmatprep.subr.mxu0 0.0
    %309 = vmatpush1.xpose.msra.mxu0 %v171
    %310 = vmatprep.subr.mxu0 0.0
    %311 = vmatpush1.xpose.msra.mxu0 %v174
    %312 = vmatprep.subr.mxu0 0.0
    %313 = vmatpush1.xpose.msra.mxu0 %v177
    %314 = vmatprep.subr.mxu0 0.0
    %315 = vmatpush1.xpose.msra.mxu0 %v180
    %316 = vmatprep.subr.mxu0 0.0
    %317 = vmatpush1.xpose.msra.mxu0 %v183
    %318 = vmatprep.subr.mxu0 0.0
    %319 = vmatpush1.xpose.msra.mxu0 %v186
    %320 = vmatprep.subr.mxu0 0.0
    %321 = vmatpush1.xpose.msra.mxu0 %v189
    %322 = vmatprep.subr.mxu0 0.0
    %323 = vmatpush1.xpose.msra.mxu0 %v192
    %324 = vmatprep.subr.mxu0 0.0
    %325 = vmatpush1.xpose.msra.mxu0 %v195
    %326 = vmatprep.subr.mxu0 0.0
    %327 = vmatpush1.xpose.msra.mxu0 %v198
    %328 = vmatprep.subr.mxu0 0.0
    %329 = vmatpush1.xpose.msra.mxu0 %v201
    %330 = vmatprep.subr.mxu0 0.0
    %331 = vmatpush1.xpose.msra.mxu0 %v204
    %332 = vmatprep.subr.mxu0 0.0
    %333 = vmatpush1.xpose.msra.mxu0 %v207
    %334 = vmatprep.subr.mxu0 0.0
    %335 = vmatpush1.xpose.msra.mxu0 %v210
    %336 = vmatprep.subr.mxu0 0.0
    %337 = vmatpush1.xpose.msra.mxu0 %v213
    %338 = vmatprep.subr.mxu0 0.0
    %339 = vmatpush1.xpose.msra.mxu0 %v216
    %340 = vmatprep.subr.mxu0 0.0
    %341 = vmatpush1.xpose.msra.mxu0 %v219
    %342 = vmatprep.subr.mxu0 0.0
    %343 = vmatpush1.xpose.msra.mxu0 %v222
    %344 = vmatprep.subr.mxu0 0.0
    %345 = vmatpush1.xpose.msra.mxu0 %v225
    %346 = vmatprep.subr.mxu0 0.0
    %347 = vmatpush1.xpose.msra.mxu0 %v228
    %348 = vmatprep.subr.mxu0 0.0
    %349 = vmatpush1.xpose.msra.mxu0 %v231
    %350 = vmatprep.subr.mxu0 0.0
    %351 = vmatpush1.xpose.msra.mxu0 %v234
    %352 = vmatprep.subr.mxu0 0.0
    %353 = vmatpush1.xpose.msra.mxu0 %v237
    %354 = vmatprep.subr.mxu0 0.0
    %355 = vmatpush1.xpose.msra.mxu0 %v240
    %356 = vmatprep.subr.mxu0 0.0
    %357 = vmatpush1.xpose.msra.mxu0 %v243
    %358 = vmatprep.subr.mxu0 0.0
    %359 = vmatpush1.xpose.msra.mxu0 %v246
    %360 = vmatprep.mubr.f32.mxu0 0.0
    %361 = vmatmul.mubr.f32.gmra.mrb[0].mxu0 %v129
    %v362 = vpop.f32.mrb[0].mxu0
    %v363 = vadd.f32 %v90, %v362
    %v364 = vpop.f32.mrb[0].mxu0
    %v365 = vadd.f32 %v90, %v364
    %366 = vmatprep.mubr.f32.mxu0 0.0
    %367 = vmatmul.mubr.f32.gmra.mrb[0].mxu0 %v132
    %v368 = vpop.f32.mrb[0].mxu0
    %v369 = vadd.f32 %v95, %v368
    %v370 = vpop.f32.mrb[0].mxu0
    %v371 = vadd.f32 %v95, %v370
    %372 = vmatprep.mubr.f32.mxu0 0.0
    %373 = vmatmul.mubr.f32.gmra.mrb[0].mxu0 %v135
    %v374 = vpop.f32.mrb[0].mxu0
    %v375 = vadd.f32 %v100, %v374
    %v376 = vpop.f32.mrb[0].mxu0
    %v377 = vadd.f32 %v100, %v376
    %378 = vmatprep.mubr.f32.mxu0 0.0
    %379 = vmatmul.mubr.f32.gmra.mrb[0].mxu0 %v138
    %v380 = vpop.f32.mrb[0].mxu0
    %v381 = vadd.f32 %v105, %v380
    %v382 = vpop.f32.mrb[0].mxu0
    %v383 = vadd.f32 %v105, %v382
    %384 = vmatprep.mubr.f32.mxu0 0.0
    %385 = vmatmul.mubr.f32.gmra.mrb[0].mxu0 %v141
    %v386 = vpop.f32.mrb[0].mxu0
    %v387 = vadd.f32 %v110, %v386
    %v388 = vpop.f32.mrb[0].mxu0
    %v389 = vadd.f32 %v110, %v388
    %390 = vmatprep.mubr.f32.mxu0 0.0
    %391 = vmatmul.mubr.f32.gmra.mrb[0].mxu0 %v144
    %v392 = vpop.f32.mrb[0].mxu0
    %v393 = vadd.f32 %v115, %v392
    %v394 = vpop.f32.mrb[0].mxu0
    %v395 = vadd.f32 %v115, %v394
    %396 = vmatprep.mubr.f32.mxu0 0.0
    %397 = vmatmul.mubr.f32.gmra.mrb[0].mxu0 %v147
    %v398 = vpop.f32.mrb[0].mxu0
    %v399 = vadd.f32 %v120, %v398
    %v400 = vpop.f32.mrb[0].mxu0
    %v401 = vadd.f32 %v120, %v400
    %402 = vmatprep.mubr.f32.mxu0 0.0
    %403 = vmatmul.mubr.f32.gmra.mrb[0].mxu0 %v150
    %v404 = vpop.f32.mrb[0].mxu0
    %v405 = vadd.f32 %v125, %v404
    %v406 = vpop.f32.mrb[0].mxu0
    %v407 = vadd.f32 %v125, %v406
    %408 = vdwg.mxu0
    %409 = vmatprep.subr.mxu0 0.0
    %410 = vmatpush1.xpose.msra.mxu0 %v249
    %411 = vmatprep.subr.mxu0 0.0
    %412 = vmatpush1.xpose.msra.mxu0 %v252
    %413 = vmatprep.subr.mxu0 0.0
    %414 = vmatpush1.xpose.msra.mxu0 %v255
    %415 = vmatprep.subr.mxu0 0.0
    %416 = vmatpush1.xpose.msra.mxu0 %v258
    %417 = vmatprep.subr.mxu0 0.0
    %418 = vmatpush1.xpose.msra.mxu0 %v261
    %419 = vmatprep.subr.mxu0 0.0
    %420 = vmatpush1.xpose.msra.mxu0 %v264
    %421 = vmatprep.subr.mxu0 0.0
    %422 = vmatpush1.xpose.msra.mxu0 %v267
    %423 = vmatprep.subr.mxu0 0.0
    %424 = vmatpush1.xpose.msra.mxu0 %v270
    %425 = vmatprep.subr.mxu0 0.0
    %426 = vmatpush1.xpose.msra.mxu0 %v273
    %427 = vmatprep.subr.mxu0 0.0
    %428 = vmatpush1.xpose.msra.mxu0 %v276
    %429 = vmatprep.subr.mxu0 0.0
    %430 = vmatpush1.xpose.msra.mxu0 %v279
    %431 = vmatprep.subr.mxu0 0.0
    %432 = vmatpush1.xpose.msra.mxu0 %v282
    %433 = vmatprep.subr.mxu0 0.0
    %434 = vmatpush1.xpose.msra.mxu0 %v285
    %435 = vmatprep.subr.mxu0 0.0
    %436 = vmatpush1.xpose.msra.mxu0 %v288
    %437 = vmatprep.subr.mxu0 0.0
    %438 = vmatpush1.xpose.msra.mxu0 %v291
    %439 = vmatprep.subr.mxu0 0.0
    %440 = vmatpush1.xpose.msra.mxu0 %v294
    %441 = vmatprep.subr.mxu0 0.0
    %442 = vmatpush1.xpose.msra.mxu0 0.0
    %443 = vmatprep.subr.mxu0 0.0
    %444 = vmatpush1.xpose.msra.mxu0 0.0
    %445 = vmatprep.subr.mxu0 0.0
    %446 = vmatpush1.xpose.msra.mxu0 0.0
    %447 = vmatprep.subr.mxu0 0.0
    %448 = vmatpush1.xpose.msra.mxu0 0.0
    %449 = vmatprep.subr.mxu0 0.0
    %450 = vmatpush1.xpose.msra.mxu0 0.0
    %451 = vmatprep.subr.mxu0 0.0
    %452 = vmatpush1.xpose.msra.mxu0 0.0
    %453 = vmatprep.subr.mxu0 0.0
    %454 = vmatpush1.xpose.msra.mxu0 0.0
    %455 = vmatprep.subr.mxu0 0.0
    %456 = vmatpush1.xpose.msra.mxu0 0.0
    %457 = vmatprep.subr.mxu0 0.0
    %458 = vmatpush1.xpose.msra.mxu0 0.0
    %459 = vmatprep.subr.mxu0 0.0
    %460 = vmatpush1.xpose.msra.mxu0 0.0
    %461 = vmatprep.subr.mxu0 0.0
    %462 = vmatpush1.xpose.msra.mxu0 0.0
    %463 = vmatprep.subr.mxu0 0.0
    %464 = vmatpush1.xpose.msra.mxu0 0.0
    %465 = vmatprep.subr.mxu0 0.0
    %466 = vmatpush1.xpose.msra.mxu0 0.0
    %467 = vmatprep.subr.mxu0 0.0
    %468 = vmatpush1.xpose.msra.mxu0 0.0
    %469 = vmatprep.subr.mxu0 0.0
    %470 = vmatpush1.xpose.msra.mxu0 0.0
    %471 = vmatprep.subr.mxu0 0.0
    %472 = vmatpush1.xpose.msra.mxu0 0.0
    %473 = vmatprep.mubr.f32.mxu0 0.0
    %474 = vmatmul.mubr.f32.gmra.mrb[0].mxu0 %v129
    %v475 = vpop.f32.mrb[0].mxu0
    %v476 = vadd.f32 %v90, %v475
    %v477 = vpop.f32.mrb[0].mxu0
    %478 = vmatprep.mubr.f32.mxu0 0.0
    %479 = vmatmul.mubr.f32.gmra.mrb[0].mxu0 %v132
    %v480 = vpop.f32.mrb[0].mxu0
    %v481 = vadd.f32 %v95, %v480
    %v482 = vpop.f32.mrb[0].mxu0
    %483 = vmatprep.mubr.f32.mxu0 0.0
    %484 = vmatmul.mubr.f32.gmra.mrb[0].mxu0 %v135
    %v485 = vpop.f32.mrb[0].mxu0
    %v486 = vadd.f32 %v100, %v485
    %v487 = vpop.f32.mrb[0].mxu0
    %488 = vmatprep.mubr.f32.mxu0 0.0
    %489 = vmatmul.mubr.f32.gmra.mrb[0].mxu0 %v138
    %v490 = vpop.f32.mrb[0].mxu0
    %v491 = vadd.f32 %v105, %v490
    %v492 = vpop.f32.mrb[0].mxu0
    %493 = vmatprep.mubr.f32.mxu0 0.0
    %494 = vmatmul.mubr.f32.gmra.mrb[0].mxu0 %v141
    %v495 = vpop.f32.mrb[0].mxu0
    %v496 = vadd.f32 %v110, %v495
    %v497 = vpop.f32.mrb[0].mxu0
    %498 = vmatprep.mubr.f32.mxu0 0.0
    %499 = vmatmul.mubr.f32.gmra.mrb[0].mxu0 %v144
    %v500 = vpop.f32.mrb[0].mxu0
    %v501 = vadd.f32 %v115, %v500
    %v502 = vpop.f32.mrb[0].mxu0
    %503 = vmatprep.mubr.f32.mxu0 0.0
    %504 = vmatmul.mubr.f32.gmra.mrb[0].mxu0 %v147
    %v505 = vpop.f32.mrb[0].mxu0
    %v506 = vadd.f32 %v120, %v505
    %v507 = vpop.f32.mrb[0].mxu0
    %508 = vmatprep.mubr.f32.mxu0 0.0
    %509 = vmatmul.mubr.f32.gmra.mrb[0].mxu0 %v150
    %v510 = vpop.f32.mrb[0].mxu0
    %v511 = vadd.f32 %v125, %v510
    %v512 = vpop.f32.mrb[0].mxu0
    %513 = vdwg.mxu0
    %v514 = vtanh.pop %v363
    %v515 = vtanh.pop %v365
    %v516 = vtanh.pop %v476
    %v517 = vtanh.pop %v369
    %v518 = vtanh.pop %v371
    %v519 = vtanh.pop %v481
    %v520 = vtanh.pop %v375
    %v521 = vtanh.pop %v377
    %v522 = vtanh.pop %v486
    %v523 = vtanh.pop %v381
    %v524 = vtanh.pop %v383
    %v525 = vtanh.pop %v491
    %v526 = vtanh.pop %v387
    %v527 = vtanh.pop %v389
    %v528 = vtanh.pop %v496
    %v529 = vtanh.pop %v393
    %v530 = vtanh.pop %v395
    %v531 = vtanh.pop %v501
    %v532 = vtanh.pop %v399
    %v533 = vtanh.pop %v401
    %v534 = vtanh.pop %v506
    %v535 = vtanh.pop %v405
    %v536 = vtanh.pop %v407
    %v537 = vtanh.pop %v511
    %v538 = vld [vmem:[%s3] sm:$0xff]
    %v539 = vld [vmem:[%s3 + $0x8] sm:$0xff]
    %v540 = vld [vmem:[%s3 + $0x10] sm:$0xff]
    %v541 = vld [vmem:[%s3 + $0x18] sm:$0xff]
    %v542 = vld [vmem:[%s3 + $0x20] sm:$0xff]
    %v543 = vld [vmem:[%s3 + $0x28] sm:$0xff]
    %v544 = vld [vmem:[%s3 + $0x30] sm:$0xff]
    %v545 = vld [vmem:[%s3 + $0x38] sm:$0xff]
    %v546 = vld [vmem:[#allocation2] sm:$0x1]
    %548 = vset.pattern.permute.xlu0 0
    %549 = vperm.xlu0 %548, %v538
    %v550 = vpop.permute.xlu0 %549
    %553 = vset.pattern.permute.xlu0 0
    %554 = vperm.xlu0 %553, %v539
    %v555 = vpop.permute.xlu0 %554
    %558 = vset.pattern.permute.xlu0 0
    %559 = vperm.xlu0 %558, %v540
    %v560 = vpop.permute.xlu0 %559
    %563 = vset.pattern.permute.xlu0 0
    %564 = vperm.xlu0 %563, %v541
    %v565 = vpop.permute.xlu0 %564
    %568 = vset.pattern.permute.xlu0 0
    %569 = vperm.xlu0 %568, %v542
    %v570 = vpop.permute.xlu0 %569
    %573 = vset.pattern.permute.xlu0 0
    %574 = vperm.xlu0 %573, %v543
    %v575 = vpop.permute.xlu0 %574
    %578 = vset.pattern.permute.xlu0 0
    %579 = vperm.xlu0 %578, %v544
    %v580 = vpop.permute.xlu0 %579
    %583 = vset.pattern.permute.xlu0 0
    %584 = vperm.xlu0 %583, %v545
    %v585 = vpop.permute.xlu0 %584
    %v587 = vmul.f32 %v550, %v514
    %v588 = vmul.f32 %v550, %v515
    %v589 = vmul.f32 %v550, %v516
    %v590 = vmul.f32 %v555, %v517
    %v591 = vmul.f32 %v555, %v518
    %v592 = vmul.f32 %v555, %v519
    %v593 = vmul.f32 %v560, %v520
    %v594 = vmul.f32 %v560, %v521
    %v595 = vmul.f32 %v560, %v522
    %v596 = vmul.f32 %v565, %v523
    %v597 = vmul.f32 %v565, %v524
    %v598 = vmul.f32 %v565, %v525
    %v599 = vmul.f32 %v570, %v526
    %v600 = vmul.f32 %v570, %v527
    %v601 = vmul.f32 %v570, %v528
    %v602 = vmul.f32 %v575, %v529
    %v603 = vmul.f32 %v575, %v530
    %v604 = vmul.f32 %v575, %v531
    %v605 = vmul.f32 %v580, %v532
    %v606 = vmul.f32 %v580, %v533
    %v607 = vmul.f32 %v580, %v534
    %v608 = vmul.f32 %v585, %v535
    %v609 = vmul.f32 %v585, %v536
    %v610 = vmul.f32 %v585, %v537
    %v611 = vadd.f32 %v587, %v590
    %v612 = vadd.f32 %v611, %v593
    %v613 = vadd.f32 %v612, %v596
    %v614 = vadd.f32 %v613, %v599
    %v615 = vadd.f32 %v614, %v602
    %v616 = vadd.f32 %v615, %v605
    %v617 = vadd.f32 %v616, %v608
    %v618 = vrot.slane %v617, 4
    %v619 = vadd.f32 %v617, %v618
    %v620 = vrot.slane %v619, 2
    %v621 = vadd.f32 %v619, %v620
    %v622 = vrot.slane %v621, 1
    %v623 = vadd.f32 %v621, %v622
    %v624 = vadd.f32 %v588, %v591
    %v625 = vadd.f32 %v624, %v594
    %v626 = vadd.f32 %v625, %v597
    %v627 = vadd.f32 %v626, %v600
    %v628 = vadd.f32 %v627, %v603
    %v629 = vadd.f32 %v628, %v606
    %v630 = vadd.f32 %v629, %v609
    %v631 = vrot.slane %v630, 4
    %v632 = vadd.f32 %v630, %v631
    %v633 = vrot.slane %v632, 2
    %v634 = vadd.f32 %v632, %v633
    %v635 = vrot.slane %v634, 1
    %v636 = vadd.f32 %v634, %v635
    %v637 = vadd.f32 %v589, %v592
    %v638 = vadd.f32 %v637, %v595
    %v639 = vadd.f32 %v638, %v598
    %v640 = vadd.f32 %v639, %v601
    %v641 = vadd.f32 %v640, %v604
    %v642 = vadd.f32 %v641, %v607
    %v643 = vadd.f32 %v642, %v610
    %v644 = vrot.slane %v643, 4
    %v645 = vadd.f32 %v643, %v644
    %v646 = vrot.slane %v645, 2
    %v647 = vadd.f32 %v645, %v646
    %v648 = vrot.slane %v647, 1
    %v649 = vadd.f32 %v647, %v648
    %651 = vset.pattern.permute.xlu0 0
    %652 = vperm.xlu0 %651, %v546
    %v653 = vpop.permute.xlu0 %652
    %v655 = vlaneseq
    %v656 = vshrl.u32 %v655, 7
    %v657 = vsub.s32 0, %v656
    %v658 = vrot.slane %v653, %v657
    %v659 = vadd.f32 %v623, %v658
    %v660 = vadd.f32 %v636, %v658
    %v661 = vadd.f32 %v649, %v658
    %v662 = vtanh.pop %v659
    %v663 = vtanh.pop %v660
    %v664 = vtanh.pop %v661
    %v668 = vcombine.low %v662, %v663
    %v670 = vunpack.c.l.s4 1966171168
    %v671 = vunpack.c.0.s8 %v670
    %v672 = vlaneseq
    %v673 = vshrl.u32 %v672, 7
    %v674 = vsub.s32 %v671, %v673
    %v675 = vrot.slane %v668, %v674
    %v677 = vunpack.c.l.s4 1966171168
    %v678 = vunpack.c.0.s8 %v677
    %v679 = vlaneseq
    %v680 = vshrl.u32 %v679, 7
    %v681 = vsub.s32 %v678, %v680
    %v682 = vrot.slane %v664, %v681
    %v683 = vcombine.low %v675, %v682
    %v685 = vunpack.c.l.s4 1966171168
    %v686 = vunpack.c.0.s8 %v685
    %v687 = vlaneseq
    %v688 = vshrl.u32 %v687, 7
    %v689 = vsub.s32 %v686, %v688
    %v690 = vrot.slane %v683, %v689
    %v692 = vlaneseq
    %vm693 = vcmp.ge.s32.totalorder %v692, 0
    %vm694 = vcmp.lt.s32.totalorder %v692, 384
    %vm695 = vmand %vm693, %vm694
    %696 = vst.msk [vmem:[#allocation3] sm:$0x7] %vm695, %v690
    // Predicated region
    $region22: #{tpu_custom_call.1} parent=1 // pred_check
      _
    $region23: #{tpu_custom_call.1} parent=1 // pred_check_branch
      %698 = sbr.rel (0) target = $region25
    $region24: #{tpu_custom_call.1} parent=1 // pred_region
      %s700 = ssub.s32 48, 48
      %701 = vsyncadd [#allocation4], %s700
      %s703 = sshll.u32 [#allocation3], 4
      %s704 = int_to_ptr.vmem [resolvable:$true] %s703
      %706 = dma.vmem_to_hbm [thread:$0]  %s704, 48, %s5, [#allocation4]
    $region25: #{tpu_custom_call.1} parent=1 // pred_fallthru
      _
    // Predicated region
    $region26: #{tpu_custom_call.1} parent=1 // pred_check
      _
    $region27: #{tpu_custom_call.1} parent=1 // pred_check_branch
      %708 = sbr.rel (0) target = $region29
    $region28: #{tpu_custom_call.1} parent=1 // pred_region
      %709 = dma.done [#allocation4], 48
    $region29: #{tpu_custom_call.1} parent=1 // pred_fallthru
      _
    %710 = vsyncpa [#allocation4], 1

</llo_original>
